<compile_context>
chip_gen: v5e
topology: v5e:2x2
jax: 0.10.0
libtpu: 0.0.40
codegen_flags: <defaults>
</compile_context>

<pallas_src>
import math

import jax
import jax.numpy as jnp
from jax import lax
from jax.experimental import pallas as pl
from jax.experimental.pallas import tpu as pltpu


def _round_up(x: int, m: int) -> int:
    return ((x + m - 1) // m) * m


def _pick_tile(dim: int, target: int, align: int):
    """Pick a tile (multiple of `align`, <= target) for dimension `dim`,
    preferring one that divides `dim` exactly so no padding pass over HBM is
    needed. Returns (tile, padded_dim)."""
    target = max(align, (min(target, _round_up(dim, align)) // align) * align)
    if dim % align == 0:
        for t in range(target, align - 1, -align):
            if dim % t == 0:
                return t, dim
    padded = _round_up(dim, target)
    return target, padded


def _vmem_limit_bytes() -> int:
    """Generation-aware scoped-VMEM limit: ~3/4 of physical VMEM
    (≈48 MiB on v7x's 64 MiB, ≈96 MiB on v5e/v6e's 128 MiB)."""
    try:
        cap = pltpu.get_tpu_info().vmem_capacity_bytes
        lim = (cap * 3) // 4
    except Exception:  # pragma: no cover - conservative fallback
        lim = 48 * 1024 * 1024
    return int(min(max(lim, 32 * 1024 * 1024), 96 * 1024 * 1024))


def _fused_weight(wmu_ref, wsig_ref, eout_ref, ein_ref):
    """Reconstruct the factorized noise tile (exact outer product, matching the
    torch weight_epsilon buffer) and fuse in f32 on the VPU (v5e-safe even when
    the weights are streamed as bf16)."""
    w_eps = eout_ref[...] * ein_ref[...]                        # (tn,1)*(1,tk) -> (tn,tk)
    return (wmu_ref[...].astype(jnp.float32)
            + wsig_ref[...].astype(jnp.float32) * w_eps)


def _noisy_linear_kernel_single_k(x_ref, wmu_ref, wsig_ref, eout_ref, ein_ref,
                                  b_ref, o_ref):
    """K fits a single tile (common small-In RL case): no accumulator scratch."""
    w = _fused_weight(wmu_ref, wsig_ref, eout_ref, ein_ref)     # (tn, tk)
    acc = lax.dot_general(
        x_ref[...].astype(jnp.float32), w,
        dimension_numbers=(((1,), (1,)), ((), ())),              # no transpose
        preferred_element_type=jnp.float32)
    o_ref[...] = (acc + b_ref[...]).astype(o_ref.dtype)


def _noisy_linear_kernel_multi_k(x_ref, wmu_ref, wsig_ref, eout_ref, ein_ref,
                                 b_ref, o_ref, acc_ref):
    """General (M, N, K) grid; K is the sequential reduction axis."""
    k = pl.program_id(2)
    w = _fused_weight(wmu_ref, wsig_ref, eout_ref, ein_ref)
    part = lax.dot_general(
        x_ref[...].astype(jnp.float32), w,
        dimension_numbers=(((1,), (1,)), ((), ())),
        preferred_element_type=jnp.float32)

    @pl.when(k == 0)
    def _first():
        acc_ref[...] = part            # assign: skip the zero-init store

    @pl.when(k > 0)
    def _accumulate():
        acc_ref[...] += part

    @pl.when(k == pl.num_programs(2) - 1)
    def _finalize():
        o_ref[...] = (acc_ref[...] + b_ref[...]).astype(o_ref.dtype)


def noisy_linear(x, weight_mu, weight_sigma, bias_mu, bias_sigma,
                 eps_in, eps_out,
                 *, tm=256, tn=512, tk=1024, weights_dtype=None):
    """Pallas-backed NoisyLinear forward.

    x:              (B, In)   float32
    weight_mu/σ:    (Out, In) float32 (PyTorch layout)
    bias_mu/σ:      (Out,)    float32
    eps_in:         (In,)     factorized gaussian noise
    eps_out:        (Out,)    factorized gaussian noise (== bias_epsilon)
    weights_dtype:  optional streaming dtype for W_mu / W_sigma (e.g.
                    jnp.bfloat16 on v6e/v7x to halve weight HBM traffic; the
                    fusion and accumulation remain f32).
    returns:        (B, Out) float32
    """
    B, In = x.shape
    Out = weight_mu.shape[0]

    tm, M_pad = _pick_tile(B, tm, 8)
    tn, N_pad = _pick_tile(Out, tn, 128)
    tk, K_pad = _pick_tile(In, tk, 128)
    m_grid, n_grid, k_grid = M_pad // tm, N_pad // tn, K_pad // tk

    # v7x megacore: with only one parallel (M, N) block the 2nd TensorCore
    # idles; splitting N costs nothing when m_grid == 1 (no weight re-stream).
    if m_grid == 1 and n_grid == 1 and N_pad >= 256:
        for t in range(((N_pad // 2) // 128) * 128, 127, -128):
            if N_pad % t == 0:
                tn, n_grid = t, N_pad // t
                break

    w_dtype = jnp.dtype(weights_dtype) if weights_dtype is not None else jnp.dtype(jnp.float32)
    wmu = weight_mu.astype(w_dtype)
    wsig = weight_sigma.astype(w_dtype)

    x_f = x.astype(jnp.float32)
    eout = eps_out.astype(jnp.float32).reshape(Out, 1)
    ein = eps_in.astype(jnp.float32).reshape(1, In)
    b_eff = (bias_mu.astype(jnp.float32)
             + bias_sigma.astype(jnp.float32) * eps_out.astype(jnp.float32)
             ).reshape(1, Out)

    # Pad only when the chosen tiles don't divide the problem — avoids extra
    # full-weight HBM read+write passes before a mem-bound kernel.
    if M_pad != B or K_pad != In:
        x_f = jnp.pad(x_f, ((0, M_pad - B), (0, K_pad - In)))
    if N_pad != Out or K_pad != In:
        wmu = jnp.pad(wmu, ((0, N_pad - Out), (0, K_pad - In)))
        wsig = jnp.pad(wsig, ((0, N_pad - Out), (0, K_pad - In)))
    if N_pad != Out:
        eout = jnp.pad(eout, ((0, N_pad - Out), (0, 0)))
        b_eff = jnp.pad(b_eff, ((0, 0), (0, N_pad - Out)))
    if K_pad != In:
        ein = jnp.pad(ein, ((0, 0), (0, K_pad - In)))

    # Advisory cost estimate reflecting actual re-streaming under this grid.
    w_isz = int(w_dtype.itemsize)
    flops = 2 * M_pad * N_pad * K_pad + 3 * N_pad * K_pad * m_grid
    bytes_accessed = (
        2 * N_pad * K_pad * w_isz * m_grid            # W_mu + W_sigma, per M tile
        + M_pad * K_pad * 4 * n_grid                  # x, per N tile
        + M_pad * N_pad * 4                           # output
        + (2 * N_pad + K_pad) * 4 * m_grid * n_grid   # eps_out, bias, eps_in (tiny)
    )
    cost = pl.CostEstimate(flops=flops, transcendentals=0,
                           bytes_accessed=bytes_accessed)

    if k_grid == 1:
        kernel = _noisy_linear_kernel_single_k
        grid = (m_grid, n_grid)
        in_specs = [
            pl.BlockSpec((tm, tk), lambda i, j: (i, 0)),   # x
            pl.BlockSpec((tn, tk), lambda i, j: (j, 0)),   # W_mu
            pl.BlockSpec((tn, tk), lambda i, j: (j, 0)),   # W_sigma
            pl.BlockSpec((tn, 1), lambda i, j: (j, 0)),    # eps_out (column)
            pl.BlockSpec((1, tk), lambda i, j: (0, 0)),    # eps_in (row)
            pl.BlockSpec((1, tn), lambda i, j: (0, j)),    # folded bias
        ]
        out_specs = pl.BlockSpec((tm, tn), lambda i, j: (i, j))
        scratch = []
        dims = ("parallel", "parallel")
    else:
        kernel = _noisy_linear_kernel_multi_k
        grid = (m_grid, n_grid, k_grid)
        in_specs = [
            pl.BlockSpec((tm, tk), lambda i, j, k: (i, k)),   # x
            pl.BlockSpec((tn, tk), lambda i, j, k: (j, k)),   # W_mu
            pl.BlockSpec((tn, tk), lambda i, j, k: (j, k)),   # W_sigma
            pl.BlockSpec((tn, 1), lambda i, j, k: (j, 0)),    # eps_out
            pl.BlockSpec((1, tk), lambda i, j, k: (0, k)),    # eps_in
            pl.BlockSpec((1, tn), lambda i, j, k: (0, j)),    # folded bias
        ]
        out_specs = pl.BlockSpec((tm, tn), lambda i, j, k: (i, j))
        scratch = [pltpu.VMEM((tm, tn), jnp.float32)]
        dims = ("parallel", "parallel", "arbitrary")

    out_p = pl.pallas_call(
        kernel,
        out_shape=jax.ShapeDtypeStruct((M_pad, N_pad), jnp.float32),
        grid_spec=pltpu.PrefetchScalarGridSpec(
            num_scalar_prefetch=0,
            grid=grid,
            in_specs=in_specs,
            out_specs=out_specs,
            scratch_shapes=scratch,
        ),
        compiler_params=pltpu.CompilerParams(
            dimension_semantics=dims,
            vmem_limit_bytes=_vmem_limit_bytes(),
        ),
        cost_estimate=cost,
    )(x_f, wmu, wsig, eout, ein, b_eff)

    if M_pad != B or N_pad != Out:
        out_p = out_p[:B, :Out]
    return out_p


# ----------------------------------------------------------------------------
# Parameter / noise construction mirroring NoisyLinear.__init__ + reset_noise()
# (the factorized eps_in / eps_out vectors are kept — weight_epsilon is never
# materialized; bias_epsilon == eps_out).
# ----------------------------------------------------------------------------

def scale_noise(key, size):
    """Factorized gaussian noise scaling: sign(x) * sqrt(|x|)."""
    v = jax.random.normal(key, (size,), dtype=jnp.float32)
    return jnp.sign(v) * jnp.sqrt(jnp.abs(v))


def init_noisy_linear_params(key, in_features, out_features, std_init=0.5):
    k_wmu, k_bmu, k_ein, k_eout = jax.random.split(key, 4)
    mu_range = 1.0 / math.sqrt(in_features)

    weight_mu = jax.random.uniform(
        k_wmu, (out_features, in_features), jnp.float32, -mu_range, mu_range)
    weight_sigma = jnp.full((out_features, in_features),
                            std_init / math.sqrt(in_features), jnp.float32)
    bias_mu = jax.random.uniform(
        k_bmu, (out_features,), jnp.float32, -mu_range, mu_range)
    bias_sigma = jnp.full((out_features,),
                          std_init / math.sqrt(out_features), jnp.float32)

    eps_in = scale_noise(k_ein, in_features)      # (In,)
    eps_out = scale_noise(k_eout, out_features)   # (Out,)  == bias_epsilon
    return (weight_mu, weight_sigma, bias_mu, bias_sigma, eps_in, eps_out)


def _reference(x, wmu, wsig, bmu, bsig, eps_in, eps_out):
    w_eps = jnp.outer(eps_out, eps_in)
    w_eff = wmu + wsig * w_eps
    b_eff = bmu + bsig * eps_out
    return jnp.matmul(x, w_eff.T, precision=lax.Precision.HIGHEST) + b_eff


if __name__ == "__main__":
    key = jax.random.PRNGKey(0)

    # 1) Small RL-style shape: K fits one tile -> scratch-free single-K kernel.
    k_p, k_x, key = jax.random.split(key, 3)
    params = init_noisy_linear_params(k_p, 32, 64)
    x = jax.random.normal(k_x, (8, 32), dtype=jnp.float32)
    out = jax.block_until_ready(noisy_linear(x, *params))
    ref = _reference(x, *params)
    assert out.shape == (8, 64)
    assert jnp.allclose(out, ref, atol=1e-4, rtol=1e-4), \
        float(jnp.max(jnp.abs(out - ref)))

    # 2) Real (M, N, K) grid exercising the K-accumulation path (grid 2x2x2).
    k_p, k_x, key = jax.random.split(key, 3)
    params2 = init_noisy_linear_params(k_p, 256, 256)
    x2 = jax.random.normal(k_x, (16, 256), dtype=jnp.float32)
    out2 = jax.block_until_ready(noisy_linear(x2, *params2, tm=8, tn=128, tk=128))
    ref2 = _reference(x2, *params2)
    assert out2.shape == (16, 256)
    assert jnp.allclose(out2, ref2, atol=1e-4, rtol=1e-4), \
        float(jnp.max(jnp.abs(out2 - ref2)))

    # 3) bf16 weight streaming (halves weight HBM traffic on v6e/v7x; fusion in
    #    f32 so it is also v5e-safe). Looser tolerance vs the f32 reference.
    k_p, k_x, key = jax.random.split(key, 3)
    params3 = init_noisy_linear_params(k_p, 256, 384)
    x3 = jax.random.normal(k_x, (32, 256), dtype=jnp.float32)
    out3 = jax.block_until_ready(
        noisy_linear(x3, *params3, weights_dtype=jnp.bfloat16))
    ref3 = _reference(x3, *params3)
    assert out3.shape == (32, 384)
    assert jnp.allclose(out3, ref3, atol=5e-2, rtol=5e-2), \
        float(jnp.max(jnp.abs(out3 - ref3)))

    print("KERNEL_OK")
</pallas_src>

<mosaic_0001>
module attributes {stable_mosaic.version = 11 : i64} {
  func.func @_noisy_linear_kernel_single_k(%arg0: i32, %arg1: i32, %arg2: memref<8x128xf32, #tpu.memory_space<vmem>>, %arg3: memref<128x128xf32, #tpu.memory_space<vmem>>, %arg4: memref<128x128xf32, #tpu.memory_space<vmem>>, %arg5: memref<128x1xf32, #tpu.memory_space<vmem>>, %arg6: memref<1x128xf32, #tpu.memory_space<vmem>>, %arg7: memref<1x128xf32, #tpu.memory_space<vmem>>, %arg8: memref<8x128xf32, #tpu.memory_space<vmem>>) attributes {dimension_semantics = [#tpu.dimension_semantics<parallel>, #tpu.dimension_semantics<parallel>], iteration_bounds = array<i64: 1, 1>, scalar_prefetch = 0 : i64, scratch_operands = 0 : i64, tpu.core_type = #tpu.core_type<tc>, window_params = [{transform_indices = @transform_0, window_bounds = array<i64: 8, 128>}, {transform_indices = @transform_1, window_bounds = array<i64: 128, 128>}, {transform_indices = @transform_2, window_bounds = array<i64: 128, 128>}, {transform_indices = @transform_3, window_bounds = array<i64: 128, 1>}, {pipeline_mode = #tpu.pipeline_mode<synchronous>, transform_indices = @transform_4, window_bounds = array<i64: 1, 128>}, {transform_indices = @transform_5, window_bounds = array<i64: 1, 128>}, {transform_indices = @transform_6, window_bounds = array<i64: 8, 128>}]} {
    %c0 = arith.constant 0 : index
    %c0_0 = arith.constant 0 : index
    %0 = vector.load %arg5[%c0, %c0_0] : memref<128x1xf32, #tpu.memory_space<vmem>>, vector<128x1xf32>
    %c0_1 = arith.constant 0 : index
    %c0_2 = arith.constant 0 : index
    %1 = vector.load %arg6[%c0_1, %c0_2] : memref<1x128xf32, #tpu.memory_space<vmem>>, vector<1x128xf32>
    %2 = vector.broadcast %0 : vector<128x1xf32> to vector<128x128xf32>
    %3 = vector.broadcast %1 : vector<1x128xf32> to vector<128x128xf32>
    %4 = arith.mulf %2, %3 : vector<128x128xf32>
    %c0_3 = arith.constant 0 : index
    %c0_4 = arith.constant 0 : index
    %5 = vector.load %arg3[%c0_3, %c0_4] : memref<128x128xf32, #tpu.memory_space<vmem>>, vector<128x128xf32>
    %c0_5 = arith.constant 0 : index
    %c0_6 = arith.constant 0 : index
    %6 = vector.load %arg4[%c0_5, %c0_6] : memref<128x128xf32, #tpu.memory_space<vmem>>, vector<128x128xf32>
    %7 = arith.mulf %6, %4 : vector<128x128xf32>
    %8 = arith.addf %5, %7 : vector<128x128xf32>
    %c0_7 = arith.constant 0 : index
    %c0_8 = arith.constant 0 : index
    %9 = vector.load %arg2[%c0_7, %c0_8] : memref<8x128xf32, #tpu.memory_space<vmem>>, vector<8x128xf32>
    %cst = arith.constant dense<0.000000e+00> : vector<8x128xf32>
    %10 = tpu.matmul %9, %8, %cst {dimension_numbers = #tpu.dot_dimension_numbers<[1], [1], [0], [0], [0, 0, 1, 0], [], []>} : vector<8x128xf32>, vector<128x128xf32>, vector<8x128xf32> -> vector<8x128xf32>
    %c0_9 = arith.constant 0 : index
    %c0_10 = arith.constant 0 : index
    %11 = vector.load %arg7[%c0_9, %c0_10] : memref<1x128xf32, #tpu.memory_space<vmem>>, vector<1x128xf32>
    %12 = vector.broadcast %11 : vector<1x128xf32> to vector<8x128xf32>
    %13 = arith.addf %10, %12 : vector<8x128xf32>
    %c0_11 = arith.constant 0 : index
    %c0_12 = arith.constant 0 : index
    %14 = vector.load %arg8[%c0_11, %c0_12] : memref<8x128xf32, #tpu.memory_space<vmem>>, vector<8x128xf32>
    tpu.vector_store %arg8[%c0_11, %c0_12], %13 {strides = array<i32>} : memref<8x128xf32, #tpu.memory_space<vmem>>, vector<8x128xf32>,
    return
  }
  func.func @transform_0(%arg0: i32, %arg1: i32) -> (i32, i32) {
    %c0_i32 = arith.constant 0 : i32
    %c0_i32_0 = arith.constant 0 : i32
    return %arg0, %c0_i32 : i32, i32
  }
  func.func @transform_1(%arg0: i32, %arg1: i32) -> (i32, i32) {
    %c0_i32 = arith.constant 0 : i32
    %c0_i32_0 = arith.constant 0 : i32
    return %arg1, %c0_i32 : i32, i32
  }
  func.func @transform_2(%arg0: i32, %arg1: i32) -> (i32, i32) {
    %c0_i32 = arith.constant 0 : i32
    %c0_i32_0 = arith.constant 0 : i32
    return %arg1, %c0_i32 : i32, i32
  }
  func.func @transform_3(%arg0: i32, %arg1: i32) -> (i32, i32) {
    %c0_i32 = arith.constant 0 : i32
    %c0_i32_0 = arith.constant 0 : i32
    return %arg1, %c0_i32 : i32, i32
  }
  func.func @transform_4(%arg0: i32, %arg1: i32) -> (i32, i32) {
    %c0_i32 = arith.constant 0 : i32
    %c0_i32_0 = arith.constant 0 : i32
    %c0_i32_1 = arith.constant 0 : i32
    return %c0_i32, %c0_i32_0 : i32, i32
  }
  func.func @transform_5(%arg0: i32, %arg1: i32) -> (i32, i32) {
    %c0_i32 = arith.constant 0 : i32
    %c0_i32_0 = arith.constant 0 : i32
    return %c0_i32, %arg1 : i32, i32
  }
  func.func @transform_6(%arg0: i32, %arg1: i32) -> (i32, i32) {
    %c0_i32 = arith.constant 0 : i32
    return %arg0, %arg1 : i32, i32
  }
}

</mosaic_0001>

<llo_original>
// kernel: tpu_custom_call.1
$region0: #{tpu_custom_call.1}
  #allocation0 [shape = 'u32[]', space=smem, size = 0x4, offset = 0x4, fixed_abs, tag = 'smem constant byte address 0x4 - core index']
  #allocation1 [shape = 'u32[72,128]{1,0:T(1,128)}', space=vmem, size = 0x9000, scoped, tag = 'internal scratch']
  %s0 = inlined_call_operand.hbm [shape: f32[8,128], index: 0, kind: input, shape index: {}]
  %s1 = inlined_call_operand.vmem [shape: f32[128,128], index: 1, kind: input, shape index: {}]
  %s2 = inlined_call_operand.hbm [shape: f32[128,128], index: 2, kind: input, shape index: {}]
  %s3 = inlined_call_operand.vmem [shape: f32[128,1], index: 3, kind: input, shape index: {}]
  %s4 = inlined_call_operand.vmem [shape: f32[1,128], index: 4, kind: input, shape index: {}]
  %s5 = inlined_call_operand.vmem [shape: f32[1,128], index: 5, kind: input, shape index: {}]
  %s6 = inlined_call_operand.hbm [shape: f32[8,128], index: 6, kind: output, shape index: {}]
  %s7 = sld [smem:[#allocation0]]
  $region42: #{tpu_custom_call.1} parent=0
    _
  %s9 = ssub.s32 1, %s7
  %s10 = scalar_select 0, %s9, %s7
  $region1: #{tpu_custom_call.1} parent=0
    #allocation2 [shape = 'u8[4096]{0}', space=vmem, size = 0x1000, scoped, tag = 'input window, operand 0, single buffered']
    #allocation3 [shape = 's32[1]{0}', space=sflag, size = 0x4, scoped, tag = 'scoped memory for tpu_custom_call.1']
    #allocation4 [shape = 's32[1]{0}', space=sflag, size = 0x4, scoped, tag = 'scoped memory for tpu_custom_call.1']
    #allocation5 [shape = 'u8[65536]{0}', space=vmem, size = 0x10000, scoped, tag = 'input window, operand 2, single buffered']
    #allocation6 [shape = 's32[1]{0}', space=sflag, size = 0x4, scoped, tag = 'scoped memory for tpu_custom_call.1']
    #allocation7 [shape = 'u8[4096]{0}', space=vmem, size = 0x1000, scoped, tag = 'output window, operand 0, single buffered']
    %11 = vsyncpa [#allocation3], 0
    %12 = vsyncpa [#allocation6], 0
    %13 = vsyncpa [#allocation4], 0
    // Predicated region
    $region2: #{tpu_custom_call.1} parent=1 // pred_check
      _
    $region3: #{tpu_custom_call.1} parent=1 // pred_check_branch
      %15 = sbr.rel (0) target = $region5
    $region4: #{tpu_custom_call.1} parent=1 // pred_region
      %17 = vsyncadd [#allocation3], 0
      %s19 = sshll.u32 %s0, 4
      %s20 = int_to_ptr.hbm [resolvable:$true] %s19
      %s21 = sshll.u32 [#allocation2], 4
      %s22 = int_to_ptr.vmem [resolvable:$true] %s21
      %24 = dma.hbm_to_vmem [thread:$0]  %s20, 128, %s22, [#allocation3]
    $region5: #{tpu_custom_call.1} parent=1 // pred_fallthru
      _
    // Predicated region
    $region6: #{tpu_custom_call.1} parent=1 // pred_check
      _
    $region7: #{tpu_custom_call.1} parent=1 // pred_check_branch
      %26 = sbr.rel (0) target = $region9
    $region8: #{tpu_custom_call.1} parent=1 // pred_region
      _
    $region9: #{tpu_custom_call.1} parent=1 // pred_fallthru
      _
    // Predicated region
    $region10: #{tpu_custom_call.1} parent=1 // pred_check
      _
    $region11: #{tpu_custom_call.1} parent=1 // pred_check_branch
      %28 = sbr.rel (0) target = $region13
    $region12: #{tpu_custom_call.1} parent=1 // pred_region
      %30 = vsyncadd [#allocation6], 0
      %s31 = sshll.u32 %s2, 4
      %s32 = int_to_ptr.hbm [resolvable:$true] %s31
      %s33 = sshll.u32 [#allocation5], 4
      %s34 = int_to_ptr.vmem [resolvable:$true] %s33
      %39 = dma.hbm_to_vmem [thread:$0]  %s32, 2048, %s34, [#allocation6], 128, 128, 8
    $region13: #{tpu_custom_call.1} parent=1 // pred_fallthru
      _
    // Predicated region
    $region14: #{tpu_custom_call.1} parent=1 // pred_check
      _
    $region15: #{tpu_custom_call.1} parent=1 // pred_check_branch
      %41 = sbr.rel (0) target = $region17
    $region16: #{tpu_custom_call.1} parent=1 // pred_region
      _
    $region17: #{tpu_custom_call.1} parent=1 // pred_fallthru
      _
    // Predicated region
    $region18: #{tpu_custom_call.1} parent=1 // pred_check
      _
    $region19: #{tpu_custom_call.1} parent=1 // pred_check_branch
      %43 = sbr.rel (0) target = $region21
    $region20: #{tpu_custom_call.1} parent=1 // pred_region
      _
    $region21: #{tpu_custom_call.1} parent=1 // pred_fallthru
      _
    // Predicated region
    $region22: #{tpu_custom_call.1} parent=1 // pred_check
      _
    $region23: #{tpu_custom_call.1} parent=1 // pred_check_branch
      %45 = sbr.rel (0) target = $region25
    $region24: #{tpu_custom_call.1} parent=1 // pred_region
      _
    $region25: #{tpu_custom_call.1} parent=1 // pred_fallthru
      _
    // Predicated region
    $region26: #{tpu_custom_call.1} parent=1 // pred_check
      _
    $region27: #{tpu_custom_call.1} parent=1 // pred_check_branch
      %47 = sbr.rel (0) target = $region29
    $region28: #{tpu_custom_call.1} parent=1 // pred_region
      %49 = dma.done [#allocation3], 128
    $region29: #{tpu_custom_call.1} parent=1 // pred_fallthru
      _
    // Predicated region
    $region30: #{tpu_custom_call.1} parent=1 // pred_check
      _
    $region31: #{tpu_custom_call.1} parent=1 // pred_check_branch
      %51 = sbr.rel (0) target = $region33
    $region32: #{tpu_custom_call.1} parent=1 // pred_region
      %53 = dma.done [#allocation6], 2048
    $region33: #{tpu_custom_call.1} parent=1 // pred_fallthru
      _
    %v54 = vld [vmem:[%s3] sm:$0xff]
    %v55 = vld [vmem:[%s3 + $0x8] sm:$0xff]
    %v56 = vld [vmem:[%s3 + $0x10] sm:$0xff]
    %v57 = vld [vmem:[%s3 + $0x18] sm:$0xff]
    %v58 = vld [vmem:[%s3 + $0x20] sm:$0xff]
    %v59 = vld [vmem:[%s3 + $0x28] sm:$0xff]
    %v60 = vld [vmem:[%s3 + $0x30] sm:$0xff]
    %v61 = vld [vmem:[%s3 + $0x38] sm:$0xff]
    %v62 = vld [vmem:[%s3 + $0x40] sm:$0xff]
    %v63 = vld [vmem:[%s3 + $0x48] sm:$0xff]
    %v64 = vld [vmem:[%s3 + $0x50] sm:$0xff]
    %v65 = vld [vmem:[%s3 + $0x58] sm:$0xff]
    %v66 = vld [vmem:[%s3 + $0x60] sm:$0xff]
    %v67 = vld [vmem:[%s3 + $0x68] sm:$0xff]
    %v68 = vld [vmem:[%s3 + $0x70] sm:$0xff]
    %v69 = vld [vmem:[%s3 + $0x78] sm:$0xff]
    %v70 = vld [vmem:[%s4] sm:$0x1]
    %72 = vset.pattern.permute.xlu0 0
    %73 = vperm.xlu0 %72, %v54
    %v74 = vpop.permute.xlu0 %73
    %77 = vset.pattern.permute.xlu0 0
    %78 = vperm.xlu0 %77, %v55
    %v79 = vpop.permute.xlu0 %78
    %82 = vset.pattern.permute.xlu0 0
    %83 = vperm.xlu0 %82, %v56
    %v84 = vpop.permute.xlu0 %83
    %87 = vset.pattern.permute.xlu0 0
    %88 = vperm.xlu0 %87, %v57
    %v89 = vpop.permute.xlu0 %88
    %92 = vset.pattern.permute.xlu0 0
    %93 = vperm.xlu0 %92, %v58
    %v94 = vpop.permute.xlu0 %93
    %97 = vset.pattern.permute.xlu0 0
    %98 = vperm.xlu0 %97, %v59
    %v99 = vpop.permute.xlu0 %98
    %102 = vset.pattern.permute.xlu0 0
    %103 = vperm.xlu0 %102, %v60
    %v104 = vpop.permute.xlu0 %103
    %107 = vset.pattern.permute.xlu0 0
    %108 = vperm.xlu0 %107, %v61
    %v109 = vpop.permute.xlu0 %108
    %112 = vset.pattern.permute.xlu0 0
    %113 = vperm.xlu0 %112, %v62
    %v114 = vpop.permute.xlu0 %113
    %117 = vset.pattern.permute.xlu0 0
    %118 = vperm.xlu0 %117, %v63
    %v119 = vpop.permute.xlu0 %118
    %122 = vset.pattern.permute.xlu0 0
    %123 = vperm.xlu0 %122, %v64
    %v124 = vpop.permute.xlu0 %123
    %127 = vset.pattern.permute.xlu0 0
    %128 = vperm.xlu0 %127, %v65
    %v129 = vpop.permute.xlu0 %128
    %132 = vset.pattern.permute.xlu0 0
    %133 = vperm.xlu0 %132, %v66
    %v134 = vpop.permute.xlu0 %133
    %137 = vset.pattern.permute.xlu0 0
    %138 = vperm.xlu0 %137, %v67
    %v139 = vpop.permute.xlu0 %138
    %142 = vset.pattern.permute.xlu0 0
    %143 = vperm.xlu0 %142, %v68
    %v144 = vpop.permute.xlu0 %143
    %147 = vset.pattern.permute.xlu0 0
    %148 = vperm.xlu0 %147, %v69
    %v149 = vpop.permute.xlu0 %148
    %v152 = vperm.slane %v70, 0
    %v154 = vmul.f32 %v74, %v152
    %v155 = vmul.f32 %v79, %v152
    %v156 = vmul.f32 %v84, %v152
    %v157 = vmul.f32 %v89, %v152
    %v158 = vmul.f32 %v94, %v152
    %v159 = vmul.f32 %v99, %v152
    %v160 = vmul.f32 %v104, %v152
    %v161 = vmul.f32 %v109, %v152
    %v162 = vmul.f32 %v114, %v152
    %v163 = vmul.f32 %v119, %v152
    %v164 = vmul.f32 %v124, %v152
    %v165 = vmul.f32 %v129, %v152
    %v166 = vmul.f32 %v134, %v152
    %v167 = vmul.f32 %v139, %v152
    %v168 = vmul.f32 %v144, %v152
    %v169 = vmul.f32 %v149, %v152
    %v170 = vld [vmem:[%s1] sm:$0xff]
    %v171 = vld [vmem:[%s1 + $0x8] sm:$0xff]
    %v172 = vld [vmem:[%s1 + $0x10] sm:$0xff]
    %v173 = vld [vmem:[%s1 + $0x18] sm:$0xff]
    %v174 = vld [vmem:[%s1 + $0x20] sm:$0xff]
    %v175 = vld [vmem:[%s1 + $0x28] sm:$0xff]
    %v176 = vld [vmem:[%s1 + $0x30] sm:$0xff]
    %v177 = vld [vmem:[%s1 + $0x38] sm:$0xff]
    %v178 = vld [vmem:[%s1 + $0x40] sm:$0xff]
    %v179 = vld [vmem:[%s1 + $0x48] sm:$0xff]
    %v180 = vld [vmem:[%s1 + $0x50] sm:$0xff]
    %v181 = vld [vmem:[%s1 + $0x58] sm:$0xff]
    %v182 = vld [vmem:[%s1 + $0x60] sm:$0xff]
    %v183 = vld [vmem:[%s1 + $0x68] sm:$0xff]
    %v184 = vld [vmem:[%s1 + $0x70] sm:$0xff]
    %v185 = vld [vmem:[%s1 + $0x78] sm:$0xff]
    %v186 = vld [vmem:[#allocation5] sm:$0xff]
    %v187 = vld [vmem:[#allocation5 + $0x8] sm:$0xff]
    %v188 = vld [vmem:[#allocation5 + $0x10] sm:$0xff]
    %v189 = vld [vmem:[#allocation5 + $0x18] sm:$0xff]
    %v190 = vld [vmem:[#allocation5 + $0x20] sm:$0xff]
    %v191 = vld [vmem:[#allocation5 + $0x28] sm:$0xff]
    %v192 = vld [vmem:[#allocation5 + $0x30] sm:$0xff]
    %v193 = vld [vmem:[#allocation5 + $0x38] sm:$0xff]
    %v194 = vld [vmem:[#allocation5 + $0x40] sm:$0xff]
    %v195 = vld [vmem:[#allocation5 + $0x48] sm:$0xff]
    %v196 = vld [vmem:[#allocation5 + $0x50] sm:$0xff]
    %v197 = vld [vmem:[#allocation5 + $0x58] sm:$0xff]
    %v198 = vld [vmem:[#allocation5 + $0x60] sm:$0xff]
    %v199 = vld [vmem:[#allocation5 + $0x68] sm:$0xff]
    %v200 = vld [vmem:[#allocation5 + $0x70] sm:$0xff]
    %v201 = vld [vmem:[#allocation5 + $0x78] sm:$0xff]
    %v202 = vmul.f32 %v186, %v154
    %v203 = vmul.f32 %v187, %v155
    %v204 = vmul.f32 %v188, %v156
    %v205 = vmul.f32 %v189, %v157
    %v206 = vmul.f32 %v190, %v158
    %v207 = vmul.f32 %v191, %v159
    %v208 = vmul.f32 %v192, %v160
    %v209 = vmul.f32 %v193, %v161
    %v210 = vmul.f32 %v194, %v162
    %v211 = vmul.f32 %v195, %v163
    %v212 = vmul.f32 %v196, %v164
    %v213 = vmul.f32 %v197, %v165
    %v214 = vmul.f32 %v198, %v166
    %v215 = vmul.f32 %v199, %v167
    %v216 = vmul.f32 %v200, %v168
    %v217 = vmul.f32 %v201, %v169
    %v218 = vadd.f32 %v170, %v202
    %v219 = vadd.f32 %v171, %v203
    %v220 = vadd.f32 %v172, %v204
    %v221 = vadd.f32 %v173, %v205
    %v222 = vadd.f32 %v174, %v206
    %v223 = vadd.f32 %v175, %v207
    %v224 = vadd.f32 %v176, %v208
    %v225 = vadd.f32 %v177, %v209
    %v226 = vadd.f32 %v178, %v210
    %v227 = vadd.f32 %v179, %v211
    %v228 = vadd.f32 %v180, %v212
    %v229 = vadd.f32 %v181, %v213
    %v230 = vadd.f32 %v182, %v214
    %v231 = vadd.f32 %v183, %v215
    %v232 = vadd.f32 %v184, %v216
    %v233 = vadd.f32 %v185, %v217
    %v234 = vld [vmem:[#allocation2] sm:$0xff]
    %v235 = vld [vmem:[%s5] sm:$0x1]
    %v237 = vperm.slane %v235, 0
    %239 = vmatpush.xpose.msra.mxu0 %v233
    %240 = vmatpush.xpose.msra.mxu0 %v232
    %241 = vmatpush.xpose.msra.mxu0 %v231
    %242 = vmatpush.xpose.msra.mxu0 %v230
    %243 = vmatpush.xpose.msra.mxu0 %v229
    %244 = vmatpush.xpose.msra.mxu0 %v228
    %245 = vmatpush.xpose.msra.mxu0 %v227
    %246 = vmatpush.xpose.msra.mxu0 %v226
    %247 = vmatpush.xpose.msra.mxu0 %v225
    %248 = vmatpush.xpose.msra.mxu0 %v224
    %249 = vmatpush.xpose.msra.mxu0 %v223
    %250 = vmatpush.xpose.msra.mxu0 %v222
    %251 = vmatpush.xpose.msra.mxu0 %v221
    %252 = vmatpush.xpose.msra.mxu0 %v220
    %253 = vmatpush.xpose.msra.mxu0 %v219
    %254 = vmatpush.xpose.msra.mxu0 %v218
    %255 = vmatmul.f32.gmra.mxu0 %v234
    %v256 = vpop.f32.mrf.mxu0
    %v257 = vadd.f32 %v237, %v256
    %258 = vdwg.mxu0
    %259 = vst [vmem:[#allocation7] sm:$0xff] %v257
    // Predicated region
    $region34: #{tpu_custom_call.1} parent=1 // pred_check
      _
    $region35: #{tpu_custom_call.1} parent=1 // pred_check_branch
      %261 = sbr.rel (0) target = $region37
    $region36: #{tpu_custom_call.1} parent=1 // pred_region
      %263 = vsyncadd [#allocation4], 0
      %s265 = sshll.u32 [#allocation7], 4
      %s266 = int_to_ptr.vmem [resolvable:$true] %s265
      %s267 = sshll.u32 %s6, 4
      %s268 = int_to_ptr.hbm [resolvable:$true] %s267
      %270 = dma.vmem_to_hbm [thread:$0]  %s266, 128, %s268, [#allocation4]
    $region37: #{tpu_custom_call.1} parent=1 // pred_fallthru
      _
    // Predicated region
    $region38: #{tpu_custom_call.1} parent=1 // pred_check
      _
    $region39: #{tpu_custom_call.1} parent=1 // pred_check_branch
      %272 = sbr.rel (0) target = $region41
    $region40: #{tpu_custom_call.1} parent=1 // pred_region
      %274 = dma.done [#allocation4], 128
    $region41: #{tpu_custom_call.1} parent=1 // pred_fallthru
      _
    %275 = vsyncpa [#allocation3], 1
    %276 = vsyncpa [#allocation6], 1
    %277 = vsyncpa [#allocation4], 1

</llo_original>
